<compile_context>
chip_gen: v7x
topology: tpu7x:2x2x1
jax: 0.10.0
libtpu: 0.0.40
codegen_flags: <defaults>
</compile_context>

<pallas_src>
import jax
import jax.numpy as jnp
from jax.experimental import pallas as pl
from jax.experimental.pallas import tpu as pltpu


def _round_up(v, m):
    return ((v + m - 1) // m) * m


# ----------------------------- Pallas kernel ------------------------------- #
def _dcn_fused_kernel(w_ref, b_ref, c00_ref, c01_ref, c10_ref, c11_ref,
                      o_ref, acc_ref):
    # w_ref:   [C_out_pad, tile_k]  bf16 (resident across p, re-blocked over k)
    # b_ref:   [C_out_pad, 1]       f32
    # cXX_ref: [1, tile_k, tile_p]  f32  (pre-weighted/masked bilinear corners)
    # o_ref:   [1, C_out_pad, tile_p] f32
    # acc_ref: [C_out_pad, tile_p]  f32 scratch accumulator
    k = pl.program_id(2)

    @pl.when(k == 0)
    def _():
        acc_ref[...] = jnp.zeros_like(acc_ref)

    # VPU: corner combine (+ modulation already folded in) and bf16 cast.
    cols = (c00_ref[0] + c01_ref[0] + c10_ref[0] + c11_ref[0]).astype(jnp.bfloat16)
    # MXU: bf16 x bf16 -> f32 accumulate.
    acc_ref[...] += jnp.dot(w_ref[...], cols, preferred_element_type=jnp.float32)

    @pl.when(k == pl.num_programs(2) - 1)
    def _():
        o_ref[0] = acc_ref[...] + b_ref[...]


def _dcn_gemm(w_pad, b_pad, corners, *, tile_k, tile_p):
    # w_pad: [C_out_pad, K_pad] bf16; b_pad: [C_out_pad, 1] f32
    # corners: 4 x [N, K_pad, P_pad] f32
    C_out_pad, K_pad = w_pad.shape
    N, _, P_pad = corners[0].shape
    grid = (N, P_pad // tile_p, K_pad // tile_k)

    corner_spec = pl.BlockSpec((1, tile_k, tile_p), lambda n, p, k: (n, k, p))
    cost = pl.CostEstimate(
        flops=2 * C_out_pad * K_pad * N * P_pad,
        transcendentals=0,
        bytes_accessed=(4 * N * K_pad * P_pad * 4          # corner streams
                        + C_out_pad * K_pad * 2            # weights (bf16)
                        + N * C_out_pad * P_pad * 4),      # output
    )

    return pl.pallas_call(
        _dcn_fused_kernel,
        out_shape=jax.ShapeDtypeStruct((N, C_out_pad, P_pad), jnp.float32),
        grid=grid,
        in_specs=[
            pl.BlockSpec((C_out_pad, tile_k), lambda n, p, k: (0, k)),  # weight
            pl.BlockSpec((C_out_pad, 1), lambda n, p, k: (0, 0)),       # bias
            corner_spec, corner_spec, corner_spec, corner_spec,         # corners
        ],
        out_specs=pl.BlockSpec((1, C_out_pad, tile_p), lambda n, p, k: (n, 0, p)),
        scratch_shapes=[pltpu.VMEM((C_out_pad, tile_p), jnp.float32)],
        compiler_params=pltpu.CompilerParams(
            dimension_semantics=("parallel", "parallel", "arbitrary")),
        cost_estimate=cost,
    )(w_pad, b_pad, *corners)


# -------- Deformable sampling glue: 4 gathers, weights/mask pre-folded ----- #
def _deform_corners(x, offset, mask, kh, kw, stride, pad, dil):
    # x: [N, C, H, W]; offset: [N, 2*kh*kw, Ho, Wo] ((dy,dx) per tap, y first);
    # mask: [N, kh*kw, Ho, Wo].
    # Returns 4 pre-weighted corner streams, each [N, C*kh*kw, P] (f32), whose
    # elementwise SUM equals the modulated deformable im2col matrix.
    N, C, H, W = x.shape
    Ho = (H + 2 * pad - dil * (kh - 1) - 1) // stride + 1
    Wo = (W + 2 * pad - dil * (kw - 1) - 1) // stride + 1
    Kk = kh * kw
    P = Ho * Wo

    h_base = jnp.arange(Ho, dtype=jnp.float32) * stride - pad
    w_base = jnp.arange(Wo, dtype=jnp.float32) * stride - pad
    ky = (jnp.arange(Kk) // kw).astype(jnp.float32) * dil
    kx = (jnp.arange(Kk) % kw).astype(jnp.float32) * dil

    off = offset.reshape(N, Kk, 2, Ho, Wo)
    y = h_base[None, None, :, None] + ky[None, :, None, None] + off[:, :, 0]
    xx = w_base[None, None, None, :] + kx[None, :, None, None] + off[:, :, 1]
    y = y.reshape(N, Kk, P)
    xx = xx.reshape(N, Kk, P)

    y0 = jnp.floor(y)
    x0 = jnp.floor(xx)
    ly, lx = y - y0, xx - x0
    hy, hx = 1.0 - ly, 1.0 - lx
    m = mask.reshape(N, Kk, P).astype(jnp.float32)

    x_flat = x.reshape(N, C, H * W)

    def corner(yc, xc, wgt):
        # zero-padding bilinear corner; validity + bilinear weight + DCNv2 mask
        # are all folded into one broadcast multiply fused with the gather.
        valid = ((yc >= 0) & (yc < H) & (xc >= 0) & (xc < W)).astype(jnp.float32)
        yi = jnp.clip(yc, 0, H - 1).astype(jnp.int32)
        xi = jnp.clip(xc, 0, W - 1).astype(jnp.int32)
        flat = (yi * W + xi).reshape(N, 1, Kk * P)
        idx = jnp.broadcast_to(flat, (N, C, Kk * P))
        g = jnp.take_along_axis(x_flat, idx, axis=-1).reshape(N, C, Kk, P)
        w_eff = (wgt * valid * m)[:, None]                  # [N, 1, Kk, P]
        return (g * w_eff).reshape(N, C * Kk, P)            # [N, K, P]

    c00 = corner(y0,       x0,       hy * hx)
    c01 = corner(y0,       x0 + 1.0, hy * lx)
    c10 = corner(y0 + 1.0, x0,       ly * hx)
    c11 = corner(y0 + 1.0, x0 + 1.0, ly * lx)
    return (c00, c01, c10, c11), Ho, Wo


# ----------------------------- Full forward -------------------------------- #
def deform_conv2d_forward(x, offset, mask, weight, bias,
                          stride=1, padding=1, dilation=1):
    # weight: [C_out, C_in, kh, kw]; groups = offset_groups = 1.
    C_out, C_in, kh, kw = weight.shape
    N = x.shape[0]
    corners, Ho, Wo = _deform_corners(x, offset, mask, kh, kw,
                                      stride, padding, dilation)
    K = C_in * kh * kw
    P = Ho * Wo

    # --- tiling: full lane width when it fits, K-blocking for huge C_in ----- #
    P_pad = _round_up(P, 128)
    if P_pad <= 1024:
        tile_p = P_pad
    else:
        tile_p = 512
        P_pad = _round_up(P_pad, tile_p)
    if K <= 2048:
        tile_k, K_pad = K, K
    else:
        tile_k = 1024
        K_pad = _round_up(K, tile_k)
    C_out_pad = _round_up(C_out, 8)

    if K_pad != K or P_pad != P:
        corners = tuple(
            jnp.pad(c, ((0, 0), (0, K_pad - K), (0, P_pad - P))) for c in corners)

    w_pad = jnp.pad(weight.reshape(C_out, K).astype(jnp.bfloat16),
                    ((0, C_out_pad - C_out), (0, K_pad - K)))
    b_pad = jnp.pad(bias.astype(jnp.float32),
                    (0, C_out_pad - C_out)).reshape(C_out_pad, 1)

    out = _dcn_gemm(w_pad, b_pad, corners, tile_k=tile_k, tile_p=tile_p)
    # (N, C_out_pad, P_pad) -> (N, C_out, Ho, Wo); reshape is free (no transpose)
    return out[:, :C_out, :P].reshape(N, C_out, Ho, Wo)


if __name__ == "__main__":
    key = jax.random.PRNGKey(0)
    k_x, k_off, k_mask, k_w, k_b = jax.random.split(key, 5)

    N, C_in, H, W = 2, 4, 16, 16
    C_out, kh, kw = 6, 3, 3
    stride, padding, dilation = 1, 1, 1
    Ho = (H + 2 * padding - dilation * (kh - 1) - 1) // stride + 1
    Wo = (W + 2 * padding - dilation * (kw - 1) - 1) // stride + 1

    # forward inputs: a = input, b = offset, c = modulation mask
    x = jax.random.normal(k_x, (N, C_in, H, W), jnp.float32)
    offset = 0.5 * jax.random.normal(k_off, (N, 2 * kh * kw, Ho, Wo), jnp.float32)
    mask = jax.nn.sigmoid(jax.random.normal(k_mask, (N, kh * kw, Ho, Wo), jnp.float32))

    # deterministic parameter init (kaiming-uniform-like scaling)
    fan_in = C_in * kh * kw
    bound = 1.0 / (fan_in ** 0.5)
    weight = jax.random.uniform(k_w, (C_out, C_in, kh, kw), jnp.float32, -bound, bound)
    bias = jax.random.uniform(k_b, (C_out,), jnp.float32, -bound, bound)

    out = deform_conv2d_forward(x, offset, mask, weight, bias,
                                stride=stride, padding=padding, dilation=dilation)
    out = jax.block_until_ready(out)
    assert out.shape == (N, C_out, Ho, Wo)

    # --- sanity checks ------------------------------------------------------ #
    corners_ref, _, _ = _deform_corners(x, offset, mask, kh, kw,
                                        stride, padding, dilation)
    cols_f32 = corners_ref[0] + corners_ref[1] + corners_ref[2] + corners_ref[3]
    w_flat = weight.reshape(C_out, -1)

    # (1) vs. reference using the same bf16-rounded operands (f32 accumulate)
    w_bf = w_flat.astype(jnp.bfloat16).astype(jnp.float32)
    c_bf = cols_f32.astype(jnp.bfloat16).astype(jnp.float32)
    ref_bf = jnp.einsum("ok,nkp->nop", w_bf, c_bf) + bias[None, :, None]
    ref_bf = ref_bf.reshape(N, C_out, Ho, Wo)
    assert jnp.max(jnp.abs(out - ref_bf)) < 1e-3

    # (2) looser check vs. full-f32 reference (bf16 rounding only)
    ref_f32 = jnp.einsum("ok,nkp->nop", w_flat, cols_f32) + bias[None, :, None]
    ref_f32 = ref_f32.reshape(N, C_out, Ho, Wo)
    assert jnp.max(jnp.abs(out - ref_f32)) < 5e-2

    print("KERNEL_OK")
</pallas_src>

<mosaic_0001>
module attributes {stable_mosaic.version = 11 : i64} {
  func.func @_dcn_fused_kernel(%arg0: i32, %arg1: i32, %arg2: i32, %arg3: memref<8x36xbf16, #tpu.memory_space<vmem>>, %arg4: memref<8x1xf32, #tpu.memory_space<vmem>>, %arg5: memref<1x36x256xf32, #tpu.memory_space<vmem>>, %arg6: memref<1x36x256xf32, #tpu.memory_space<vmem>>, %arg7: memref<1x36x256xf32, #tpu.memory_space<vmem>>, %arg8: memref<1x36x256xf32, #tpu.memory_space<vmem>>, %arg9: memref<1x8x256xf32, #tpu.memory_space<vmem>>, %arg10: memref<8x256xf32, #tpu.memory_space<vmem>>) attributes {dimension_semantics = [#tpu.dimension_semantics<parallel>, #tpu.dimension_semantics<parallel>, #tpu.dimension_semantics<arbitrary>], iteration_bounds = array<i64: 2, 1, 1>, scalar_prefetch = 0 : i64, scratch_operands = 1 : i64, tpu.core_type = #tpu.core_type<tc>, window_params = [{transform_indices = @transform_0, window_bounds = array<i64: 8, 36>}, {pipeline_mode = #tpu.pipeline_mode<synchronous>, transform_indices = @transform_1, window_bounds = array<i64: 8, 1>}, {transform_indices = @transform_2, window_bounds = array<i64: 1, 36, 256>}, {transform_indices = @transform_3, window_bounds = array<i64: 1, 36, 256>}, {transform_indices = @transform_4, window_bounds = array<i64: 1, 36, 256>}, {transform_indices = @transform_5, window_bounds = array<i64: 1, 36, 256>}, {transform_indices = @transform_6, window_bounds = array<i64: 1, 8, 256>}]} {
    %c0_i32 = arith.constant 0 : i32
    %0 = arith.cmpi eq, %arg2, %c0_i32 : i32
    %1 = arith.extui %0 : i1 to i32
    %c0_i32_0 = arith.constant 0 : i32
    %2 = arith.cmpi ne, %1, %c0_i32_0 : i32
    scf.if %2 {
      %cst_20 = arith.constant 0.000000e+00 : f32
      %23 = vector.broadcast %cst_20 : f32 to vector<8x256xf32>
      %c0_21 = arith.constant 0 : index
      %c0_22 = arith.constant 0 : index
      %24 = vector.load %arg10[%c0_21, %c0_22] : memref<8x256xf32, #tpu.memory_space<vmem>>, vector<8x256xf32>
      tpu.vector_store %arg10[%c0_21, %c0_22], %23 {strides = array<i32>} : memref<8x256xf32, #tpu.memory_space<vmem>>, vector<8x256xf32>,
    } else {
    }
    %c0 = arith.constant 0 : index
    %c0_1 = arith.constant 0 : index
    %c0_2 = arith.constant 0 : index
    %3 = vector.load %arg5[%c0, %c0_1, %c0_2] : memref<1x36x256xf32, #tpu.memory_space<vmem>>, vector<1x36x256xf32>
    %4 = vector.shape_cast %3 : vector<1x36x256xf32> to vector<36x256xf32>
    %c0_3 = arith.constant 0 : index
    %c0_4 = arith.constant 0 : index
    %c0_5 = arith.constant 0 : index
    %5 = vector.load %arg6[%c0_3, %c0_4, %c0_5] : memref<1x36x256xf32, #tpu.memory_space<vmem>>, vector<1x36x256xf32>
    %6 = vector.shape_cast %5 : vector<1x36x256xf32> to vector<36x256xf32>
    %7 = arith.addf %4, %6 : vector<36x256xf32>
    %c0_6 = arith.constant 0 : index
    %c0_7 = arith.constant 0 : index
    %c0_8 = arith.constant 0 : index
    %8 = vector.load %arg7[%c0_6, %c0_7, %c0_8] : memref<1x36x256xf32, #tpu.memory_space<vmem>>, vector<1x36x256xf32>
    %9 = vector.shape_cast %8 : vector<1x36x256xf32> to vector<36x256xf32>
    %10 = arith.addf %7, %9 : vector<36x256xf32>
    %c0_9 = arith.constant 0 : index
    %c0_10 = arith.constant 0 : index
    %c0_11 = arith.constant 0 : index
    %11 = vector.load %arg8[%c0_9, %c0_10, %c0_11] : memref<1x36x256xf32, #tpu.memory_space<vmem>>, vector<1x36x256xf32>
    %12 = vector.shape_cast %11 : vector<1x36x256xf32> to vector<36x256xf32>
    %13 = arith.addf %10, %12 : vector<36x256xf32>
    %14 = arith.truncf %13 : vector<36x256xf32> to vector<36x256xbf16>
    %c0_12 = arith.constant 0 : index
    %c0_13 = arith.constant 0 : index
    %15 = vector.load %arg10[%c0_12, %c0_13] : memref<8x256xf32, #tpu.memory_space<vmem>>, vector<8x256xf32>
    %c0_14 = arith.constant 0 : index
    %c0_15 = arith.constant 0 : index
    %16 = vector.load %arg3[%c0_14, %c0_15] : memref<8x36xbf16, #tpu.memory_space<vmem>>, vector<8x36xbf16>
    %cst = arith.constant dense<0.000000e+00> : vector<8x256xf32>
    %17 = tpu.matmul %16, %14, %cst {dimension_numbers = #tpu.dot_dimension_numbers<[1], [0], [0], [1], [0, 0, 1, 1], [], []>} : vector<8x36xbf16>, vector<36x256xbf16>, vector<8x256xf32> -> vector<8x256xf32>
    %18 = arith.addf %15, %17 : vector<8x256xf32>
    %c0_16 = arith.constant 0 : index
    %c0_17 = arith.constant 0 : index
    %19 = vector.load %arg10[%c0_16, %c0_17] : memref<8x256xf32, #tpu.memory_space<vmem>>, vector<8x256xf32>
    tpu.vector_store %arg10[%c0_16, %c0_17], %18 {strides = array<i32>} : memref<8x256xf32, #tpu.memory_space<vmem>>, vector<8x256xf32>,
    %c0_i32_18 = arith.constant 0 : i32
    %20 = arith.cmpi eq, %arg2, %c0_i32_18 : i32
    %21 = arith.extui %20 : i1 to i32
    %c0_i32_19 = arith.constant 0 : i32
    %22 = arith.cmpi ne, %21, %c0_i32_19 : i32
    scf.if %22 {
      %c0_20 = arith.constant 0 : index
      %c0_21 = arith.constant 0 : index
      %23 = vector.load %arg10[%c0_20, %c0_21] : memref<8x256xf32, #tpu.memory_space<vmem>>, vector<8x256xf32>
      %c0_22 = arith.constant 0 : index
      %c0_23 = arith.constant 0 : index
      %24 = vector.load %arg4[%c0_22, %c0_23] : memref<8x1xf32, #tpu.memory_space<vmem>>, vector<8x1xf32>
      %25 = vector.broadcast %24 : vector<8x1xf32> to vector<8x256xf32>
      %26 = arith.addf %23, %25 : vector<8x256xf32>
      %c0_24 = arith.constant 0 : index
      %c0_25 = arith.constant 0 : index
      %c0_26 = arith.constant 0 : index
      %27 = vector.load %arg9[%c0_24, %c0_25, %c0_26] : memref<1x8x256xf32, #tpu.memory_space<vmem>>, vector<1x8x256xf32>
      %28 = vector.shape_cast %27 : vector<1x8x256xf32> to vector<8x256xf32>
      %29 = vector.shape_cast %26 : vector<8x256xf32> to vector<1x8x256xf32>
      tpu.vector_store %arg9[%c0_24, %c0_25, %c0_26], %29 {strides = array<i32>} : memref<1x8x256xf32, #tpu.memory_space<vmem>>, vector<1x8x256xf32>,
    } else {
    }
    return
  }
  func.func @transform_0(%arg0: i32, %arg1: i32, %arg2: i32) -> (i32, i32) {
    %c0_i32 = arith.constant 0 : i32
    %c0_i32_0 = arith.constant 0 : i32
    return %c0_i32, %arg2 : i32, i32
  }
  func.func @transform_1(%arg0: i32, %arg1: i32, %arg2: i32) -> (i32, i32) {
    %c0_i32 = arith.constant 0 : i32
    %c0_i32_0 = arith.constant 0 : i32
    %c0_i32_1 = arith.constant 0 : i32
    return %c0_i32, %c0_i32_0 : i32, i32
  }
  func.func @transform_2(%arg0: i32, %arg1: i32, %arg2: i32) -> (i32, i32, i32) {
    %c0_i32 = arith.constant 0 : i32
    return %arg0, %arg2, %arg1 : i32, i32, i32
  }
  func.func @transform_3(%arg0: i32, %arg1: i32, %arg2: i32) -> (i32, i32, i32) {
    %c0_i32 = arith.constant 0 : i32
    return %arg0, %arg2, %arg1 : i32, i32, i32
  }
  func.func @transform_4(%arg0: i32, %arg1: i32, %arg2: i32) -> (i32, i32, i32) {
    %c0_i32 = arith.constant 0 : i32
    return %arg0, %arg2, %arg1 : i32, i32, i32
  }
  func.func @transform_5(%arg0: i32, %arg1: i32, %arg2: i32) -> (i32, i32, i32) {
    %c0_i32 = arith.constant 0 : i32
    return %arg0, %arg2, %arg1 : i32, i32, i32
  }
  func.func @transform_6(%arg0: i32, %arg1: i32, %arg2: i32) -> (i32, i32, i32) {
    %c0_i32 = arith.constant 0 : i32
    %c0_i32_0 = arith.constant 0 : i32
    return %arg0, %c0_i32, %arg1 : i32, i32, i32
  }
}

</mosaic_0001>

<llo_original>
// kernel: tpu_custom_call.1
$region0: #{tpu_custom_call.1}
  #allocation0 [shape = 'u32[]', space=smem, size = 0x4, offset = 0x4, fixed_abs, tag = 'smem constant byte address 0x4 - core index']
  #allocation1 [shape = 'u32[144,128]{1,0:T(1,128)}', space=vmem, size = 0x12000, scoped, tag = 'internal scratch']
  #allocation2 [shape = 'f32[8,256]{1,0:T(8,128)}', space=vmem, size = 0x2000, scoped, tag = 'scratch operand']
  %s0 = inlined_call_operand.vmem [shape: bf16[8,36], index: 0, kind: input, shape index: {}]
  %s1 = inlined_call_operand.vmem [shape: f32[8,1], index: 1, kind: input, shape index: {}]
  %s2 = inlined_call_operand.vmem [shape: f32[2,36,256], index: 2, kind: input, shape index: {}]
  %s3 = inlined_call_operand.vmem [shape: f32[2,36,256], index: 3, kind: input, shape index: {}]
  %s4 = inlined_call_operand.vmem [shape: f32[2,36,256], index: 4, kind: input, shape index: {}]
  %s5 = inlined_call_operand.vmem [shape: f32[2,36,256], index: 5, kind: input, shape index: {}]
  %s6 = inlined_call_operand.hbm [shape: f32[2,8,256], index: 6, kind: output, shape index: {}]
  %s7 = sld [smem:[#allocation0]]
  $region65: #{tpu_custom_call.1} parent=0
    _
  %s9 = ssub.s32 1, %s7
  %s10 = scalar_select 0, %s9, %s7
  $region1: #{tpu_custom_call.1} parent=0
    #allocation3 [shape = 'u8[16384]{0}', space=vmem, size = 0x4000, scoped, tag = 'output window, operand 0']
    #allocation4 [shape = 's32[2]{0}', space=sflag, size = 0x8, scoped, tag = 'scoped memory for tpu_custom_call.1']
    %11 = vsyncpa [#allocation4], 0
    %s12 = scalar_lea.sflag [#allocation4], 1
    %13 = vsyncpa %s12, 0
    loop: start=0, step=1, limit=4
    $region2: #{tpu_custom_call.1} parent=1 // loop_pre_header
      _
    $region3: #{tpu_custom_call.1} parent=1 // loop_header
      %s15 = sphi 0, %s19
      %p16 = scmp.ge.s32.totalorder %s15, 4
      %s22 = sphi 0, %s41
      %s23 = sphi 0, %s37
      %s24 = sphi 0, %s33
      %s25 = sphi 0, %s22
      %s26 = sphi 0, %s23
      %s27 = sphi 0, %s24
      %s28 = sphi 0, %s25
      %s29 = sphi 0, %s26
      %s30 = sphi 0, %s27
      %s44 = sphi 0, %s46
      %s47 = sphi 0, %s44
      %s48 = sphi 0, %s47
      %s64 = sphi 0, %s48
      %s68 = sphi 0, %s68
      %s70 = sphi 0, %s68
      %s71 = sphi 0, %s70
      %s85 = sphi 0, %s71
      %s95 = sphi 0, %s97
      %s98 = sphi 0, %s95
      %s99 = sphi 0, %s98
      %s115 = sphi 0, %s99
      %s125 = sphi 0, %s127
      %s128 = sphi 0, %s125
      %s129 = sphi 0, %s128
      %s145 = sphi 0, %s129
      %s155 = sphi 0, %s157
      %s158 = sphi 0, %s155
      %s159 = sphi 0, %s158
      %s175 = sphi 0, %s159
      %s185 = sphi 0, %s187
      %s188 = sphi 0, %s185
      %s189 = sphi 0, %s188
      %s205 = sphi 0, %s189
      %s213 = sphi 0, %s215
      %s216 = sphi 0, %s213
      %s217 = sphi 0, %s216
      %s233 = sphi 0, %s217
    $region4: #{tpu_custom_call.1} parent=1 // loop_header_branch
      %18 = sbr.rel (%p16) target = $region8
    $region5: #{tpu_custom_call.1} parent=1 // loop_body
      %s20 = ssub.s32 %s15, 1
      %s21 = ssub.s32 %s15, 2
      %s31 = sadd.s32 1, %s24
      %p32 = scmp.ge.s32.totalorder %s31, 1
      %s33 = scalar_select %p32, 0, %s31
      %s34 = sadd.s32 1, %s23
      %s35 = scalar_select %p32, %s34, %s23
      %p36 = scmp.ge.s32.totalorder %s35, 1
      %s37 = scalar_select %p36, 0, %s35
      %s38 = sadd.s32 1, %s22
      %s39 = scalar_select %p36, %s38, %s22
      %p40 = scmp.ge.s32.totalorder %s39, 2
      %s41 = scalar_select %p40, 0, %s39
      %s42 = ssub.s32 %s24, %s33
      %p43 = scmp.eq.s32.totalorder %s42, 0
      %s45 = sadd.s32 %s44, 1
      %s46 = scalar_select %p43, %s44, %s45
      %p49 = pneg %p43
      %p50 = scmp.eq.s32.totalorder %s15, 1
      %p51 = por %p49, %p50
      %p52 = scmp.ne.s32.totalorder %s44, %s47
      %p53 = scmp.eq.s32.totalorder %s15, 0
      %p54 = por %p52, %p53
      %p55 = scmp.ne.s32.totalorder %s44, %s47
      %p56 = scmp.eq.s32.totalorder %s20, 1
      %p57 = por %p55, %p56
      %p58 = scmp.ne.s32.totalorder %s47, %s48
      %p59 = scmp.eq.s32.totalorder %s20, 0
      %p60 = por %p58, %p59
      %p61 = scmp.ne.s32.totalorder %s47, %s48
      %p62 = scmp.eq.s32.totalorder %s21, 1
      %p63 = por %p61, %p62
      %p65 = scmp.ne.s32.totalorder %s48, %s64
      %p66 = scmp.eq.s32.totalorder %s21, 0
      %p67 = por %p65, %p66
      %s69 = sadd.s32 %s68, 1
      %p72 = scmp.eq.s32.totalorder %s15, 1
      %p73 = scmp.ne.s32.totalorder %s68, %s70
      %p74 = scmp.eq.s32.totalorder %s15, 0
      %p75 = por %p73, %p74
      %p76 = scmp.ne.s32.totalorder %s68, %s70
      %p77 = scmp.eq.s32.totalorder %s20, 1
      %p78 = por %p76, %p77
      %p79 = scmp.ne.s32.totalorder %s70, %s71
      %p80 = scmp.eq.s32.totalorder %s20, 0
      %p81 = por %p79, %p80
      %p82 = scmp.ne.s32.totalorder %s70, %s71
      %p83 = scmp.eq.s32.totalorder %s21, 1
      %p84 = por %p82, %p83
      %p86 = scmp.ne.s32.totalorder %s71, %s85
      %p87 = scmp.eq.s32.totalorder %s21, 0
      %p88 = por %p86, %p87
      %s89 = ssub.s32 %s22, %s41
      %s90 = ssub.s32 %s24, %s33
      %s91 = sor.u32 %s89, %s90
      %s92 = ssub.s32 %s23, %s37
      %s93 = sor.u32 %s91, %s92
      %p94 = scmp.eq.s32.totalorder %s93, 0
      %s96 = sadd.s32 %s95, 1
      %s97 = scalar_select %p94, %s95, %s96
      %p100 = pneg %p94
      %p101 = scmp.eq.s32.totalorder %s15, 1
      %p102 = por %p100, %p101
      %p103 = scmp.ne.s32.totalorder %s95, %s98
      %p104 = scmp.eq.s32.totalorder %s15, 0
      %p105 = por %p103, %p104
      %p106 = scmp.ne.s32.totalorder %s95, %s98
      %p107 = scmp.eq.s32.totalorder %s20, 1
      %p108 = por %p106, %p107
      %p109 = scmp.ne.s32.totalorder %s98, %s99
      %p110 = scmp.eq.s32.totalorder %s20, 0
      %p111 = por %p109, %p110
      %p112 = scmp.ne.s32.totalorder %s98, %s99
      %p113 = scmp.eq.s32.totalorder %s21, 1
      %p114 = por %p112, %p113
      %p116 = scmp.ne.s32.totalorder %s99, %s115
      %p117 = scmp.eq.s32.totalorder %s21, 0
      %p118 = por %p116, %p117
      %s119 = ssub.s32 %s22, %s41
      %s120 = ssub.s32 %s24, %s33
      %s121 = sor.u32 %s119, %s120
      %s122 = ssub.s32 %s23, %s37
      %s123 = sor.u32 %s121, %s122
      %p124 = scmp.eq.s32.totalorder %s123, 0
      %s126 = sadd.s32 %s125, 1
      %s127 = scalar_select %p124, %s125, %s126
      %p130 = pneg %p124
      %p131 = scmp.eq.s32.totalorder %s15, 1
      %p132 = por %p130, %p131
      %p133 = scmp.ne.s32.totalorder %s125, %s128
      %p134 = scmp.eq.s32.totalorder %s15, 0
      %p135 = por %p133, %p134
      %p136 = scmp.ne.s32.totalorder %s125, %s128
      %p137 = scmp.eq.s32.totalorder %s20, 1
      %p138 = por %p136, %p137
      %p139 = scmp.ne.s32.totalorder %s128, %s129
      %p140 = scmp.eq.s32.totalorder %s20, 0
      %p141 = por %p139, %p140
      %p142 = scmp.ne.s32.totalorder %s128, %s129
      %p143 = scmp.eq.s32.totalorder %s21, 1
      %p144 = por %p142, %p143
      %p146 = scmp.ne.s32.totalorder %s129, %s145
      %p147 = scmp.eq.s32.totalorder %s21, 0
      %p148 = por %p146, %p147
      %s149 = ssub.s32 %s22, %s41
      %s150 = ssub.s32 %s24, %s33
      %s151 = sor.u32 %s149, %s150
      %s152 = ssub.s32 %s23, %s37
      %s153 = sor.u32 %s151, %s152
      %p154 = scmp.eq.s32.totalorder %s153, 0
      %s156 = sadd.s32 %s155, 1
      %s157 = scalar_select %p154, %s155, %s156
      %p160 = pneg %p154
      %p161 = scmp.eq.s32.totalorder %s15, 1
      %p162 = por %p160, %p161
      %p163 = scmp.ne.s32.totalorder %s155, %s158
      %p164 = scmp.eq.s32.totalorder %s15, 0
      %p165 = por %p163, %p164
      %p166 = scmp.ne.s32.totalorder %s155, %s158
      %p167 = scmp.eq.s32.totalorder %s20, 1
      %p168 = por %p166, %p167
      %p169 = scmp.ne.s32.totalorder %s158, %s159
      %p170 = scmp.eq.s32.totalorder %s20, 0
      %p171 = por %p169, %p170
      %p172 = scmp.ne.s32.totalorder %s158, %s159
      %p173 = scmp.eq.s32.totalorder %s21, 1
      %p174 = por %p172, %p173
      %p176 = scmp.ne.s32.totalorder %s159, %s175
      %p177 = scmp.eq.s32.totalorder %s21, 0
      %p178 = por %p176, %p177
      %s179 = ssub.s32 %s22, %s41
      %s180 = ssub.s32 %s24, %s33
      %s181 = sor.u32 %s179, %s180
      %s182 = ssub.s32 %s23, %s37
      %s183 = sor.u32 %s181, %s182
      %p184 = scmp.eq.s32.totalorder %s183, 0
      %s186 = sadd.s32 %s185, 1
      %s187 = scalar_select %p184, %s185, %s186
      %p190 = pneg %p184
      %p191 = scmp.eq.s32.totalorder %s15, 1
      %p192 = por %p190, %p191
      %p193 = scmp.ne.s32.totalorder %s185, %s188
      %p194 = scmp.eq.s32.totalorder %s15, 0
      %p195 = por %p193, %p194
      %p196 = scmp.ne.s32.totalorder %s185, %s188
      %p197 = scmp.eq.s32.totalorder %s20, 1
      %p198 = por %p196, %p197
      %p199 = scmp.ne.s32.totalorder %s188, %s189
      %p200 = scmp.eq.s32.totalorder %s20, 0
      %p201 = por %p199, %p200
      %p202 = scmp.ne.s32.totalorder %s188, %s189
      %p203 = scmp.eq.s32.totalorder %s21, 1
      %p204 = por %p202, %p203
      %p206 = scmp.ne.s32.totalorder %s189, %s205
      %p207 = scmp.eq.s32.totalorder %s21, 0
      %p208 = por %p206, %p207
      %s209 = ssub.s32 %s22, %s41
      %s210 = ssub.s32 %s23, %s37
      %s211 = sor.u32 %s209, %s210
      %p212 = scmp.eq.s32.totalorder %s211, 0
      %s214 = sadd.s32 %s213, 1
      %s215 = scalar_select %p212, %s213, %s214
      %p218 = pneg %p212
      %p219 = scmp.eq.s32.totalorder %s15, 1
      %p220 = por %p218, %p219
      %p221 = scmp.ne.s32.totalorder %s213, %s216
      %p222 = scmp.eq.s32.totalorder %s15, 0
      %p223 = por %p221, %p222
      %p224 = scmp.ne.s32.totalorder %s213, %s216
      %p225 = scmp.eq.s32.totalorder %s20, 1
      %p226 = por %p224, %p225
      %p227 = scmp.ne.s32.totalorder %s216, %s217
      %p228 = scmp.eq.s32.totalorder %s20, 0
      %p229 = por %p227, %p228
      %p230 = scmp.ne.s32.totalorder %s216, %s217
      %p231 = scmp.eq.s32.totalorder %s21, 1
      %p232 = por %p230, %p231
      %p234 = scmp.ne.s32.totalorder %s217, %s233
      %p235 = scmp.eq.s32.totalorder %s21, 0
      %p236 = por %p234, %p235
      %p237 = scmp.le.s32.totalorder 1, %s15
      %p238 = scmp.lt.s32.totalorder %s15, 3
      %p239 = pnand %p237, %p238
      %p240 = pneg %p239
      // Predicated region
      $region9: #{tpu_custom_call.1} parent=5 // pred_check
        _
      $region10: #{tpu_custom_call.1} parent=5 // pred_check_branch
        %242 = sbr.rel (%p239) target = $region12
      $region11: #{tpu_custom_call.1} parent=5 // pred_region
        %s243 = ssub.s32 %s15, 1
        // Predicated region
        $region13: #{tpu_custom_call.1} parent=11 // pred_check
          %p244 = pneg %p60
        $region14: #{tpu_custom_call.1} parent=11 // pred_check_branch
          %246 = sbr.rel (%p244) target = $region16
        $region15: #{tpu_custom_call.1} parent=11 // pred_region
          %p247 = scmp.lt.s32.totalorder %s27, 0
          %s248 = scalar_select %p247, %s27, 0
          %s249 = smul.addr %s248, 4
          %s250 = scalar_lea.vmem %s0, %s249
        $region16: #{tpu_custom_call.1} parent=11 // pred_fallthru
          _
        // Predicated region
        $region17: #{tpu_custom_call.1} parent=11 // pred_check
          %p251 = pneg %p81
        $region18: #{tpu_custom_call.1} parent=11 // pred_check_branch
          %253 = sbr.rel (%p251) target = $region20
        $region19: #{tpu_custom_call.1} parent=11 // pred_region
          _
        $region20: #{tpu_custom_call.1} parent=11 // pred_fallthru
          _
      $region12: #{tpu_custom_call.1} parent=5 // pred_fallthru
        _
      %p254 = scmp.lt.s32.totalorder %s15, 2
      // Predicated region
      $region21: #{tpu_custom_call.1} parent=5 // pred_check
        %p255 = pneg %p254
      $region22: #{tpu_custom_call.1} parent=5 // pred_check_branch
        %257 = sbr.rel (%p255) target = $region24
      $region23: #{tpu_custom_call.1} parent=5 // pred_region
        // Predicated region
        $region25: #{tpu_custom_call.1} parent=23 // pred_check
          %p258 = pneg %p105
        $region26: #{tpu_custom_call.1} parent=23 // pred_check_branch
          %260 = sbr.rel (%p258) target = $region28
        $region27: #{tpu_custom_call.1} parent=23 // pred_region
          %s261 = smul.u32 5, %s24
          %s262 = smul.u32 2, %s23
          %p263 = scmp.lt.s32.totalorder %s22, 1
          %s264 = scalar_select %p263, %s22, 1
          %p265 = scmp.lt.s32.totalorder %s261, 4
          %s266 = scalar_select %p265, %s261, 4
          %p267 = scmp.lt.s32.totalorder %s262, 1
          %s268 = scalar_select %p267, %s262, 1
          %s269 = smul.addr %s266, 2
          %s270 = sadd.s32 %s268, %s269
          %s271 = smul.addr %s264, 10
          %s272 = sadd.s32 %s270, %s271
          %s273 = smul.addr %s272, 8
          %s274 = scalar_lea.vmem %s2, %s273
          %s275 = smul.u32 5, %s24
          %s276 = smul.u32 2, %s23
        $region28: #{tpu_custom_call.1} parent=23 // pred_fallthru
          _
        // Predicated region
        $region29: #{tpu_custom_call.1} parent=23 // pred_check
          %p277 = pneg %p135
        $region30: #{tpu_custom_call.1} parent=23 // pred_check_branch
          %279 = sbr.rel (%p277) target = $region32
        $region31: #{tpu_custom_call.1} parent=23 // pred_region
          %s280 = smul.u32 5, %s24
          %s281 = smul.u32 2, %s23
          %p282 = scmp.lt.s32.totalorder %s22, 1
          %s283 = scalar_select %p282, %s22, 1
          %p284 = scmp.lt.s32.totalorder %s280, 4
          %s285 = scalar_select %p284, %s280, 4
          %p286 = scmp.lt.s32.totalorder %s281, 1
          %s287 = scalar_select %p286, %s281, 1
          %s288 = smul.addr %s285, 2
          %s289 = sadd.s32 %s287, %s288
          %s290 = smul.addr %s283, 10
          %s291 = sadd.s32 %s289, %s290
          %s292 = smul.addr %s291, 8
          %s293 = scalar_lea.vmem %s3, %s292
          %s294 = smul.u32 5, %s24
          %s295 = smul.u32 2, %s23
        $region32: #{tpu_custom_call.1} parent=23 // pred_fallthru
          _
        // Predicated region
        $region33: #{tpu_custom_call.1} parent=23 // pred_check
          %p296 = pneg %p165
        $region34: #{tpu_custom_call.1} parent=23 // pred_check_branch
          %298 = sbr.rel (%p296) target = $region36
        $region35: #{tpu_custom_call.1} parent=23 // pred_region
          %s299 = smul.u32 5, %s24
          %s300 = smul.u32 2, %s23
          %p301 = scmp.lt.s32.totalorder %s22, 1
          %s302 = scalar_select %p301, %s22, 1
          %p303 = scmp.lt.s32.totalorder %s299, 4
          %s304 = scalar_select %p303, %s299, 4
          %p305 = scmp.lt.s32.totalorder %s300, 1
          %s306 = scalar_select %p305, %s300, 1
          %s307 = smul.addr %s304, 2
          %s308 = sadd.s32 %s306, %s307
          %s309 = smul.addr %s302, 10
          %s310 = sadd.s32 %s308, %s309
          %s311 = smul.addr %s310, 8
          %s312 = scalar_lea.vmem %s4, %s311
          %s313 = smul.u32 5, %s24
          %s314 = smul.u32 2, %s23
        $region36: #{tpu_custom_call.1} parent=23 // pred_fallthru
          _
        // Predicated region
        $region37: #{tpu_custom_call.1} parent=23 // pred_check
          %p315 = pneg %p195
        $region38: #{tpu_custom_call.1} parent=23 // pred_check_branch
          %317 = sbr.rel (%p315) target = $region40
        $region39: #{tpu_custom_call.1} parent=23 // pred_region
          %s318 = smul.u32 5, %s24
          %s319 = smul.u32 2, %s23
          %p320 = scmp.lt.s32.totalorder %s22, 1
          %s321 = scalar_select %p320, %s22, 1
          %p322 = scmp.lt.s32.totalorder %s318, 4
          %s323 = scalar_select %p322, %s318, 4
          %p324 = scmp.lt.s32.totalorder %s319, 1
          %s325 = scalar_select %p324, %s319, 1
          %s326 = smul.addr %s323, 2
          %s327 = sadd.s32 %s325, %s326
          %s328 = smul.addr %s321, 10
          %s329 = sadd.s32 %s327, %s328
          %s330 = smul.addr %s329, 8
          %s331 = scalar_lea.vmem %s5, %s330
          %s332 = smul.u32 5, %s24
          %s333 = smul.u32 2, %s23
        $region40: #{tpu_custom_call.1} parent=23 // pred_fallthru
          _
      $region24: #{tpu_custom_call.1} parent=5 // pred_fallthru
        _
      %p334 = scmp.le.s32.totalorder 1, %s15
      %p335 = scmp.lt.s32.totalorder %s15, 3
      %p336 = pnand %p334, %p335
      %p337 = pneg %p336
      // Predicated region
      $region41: #{tpu_custom_call.1} parent=5 // pred_check
        _
      $region42: #{tpu_custom_call.1} parent=5 // pred_check_branch
        %339 = sbr.rel (%p336) target = $region44
      $region43: #{tpu_custom_call.1} parent=5 // pred_region
        %s340 = ssub.s32 %s15, 1
        %p341 = scmp.lt.s32.totalorder %s27, 0
        %s342 = scalar_select %p341, %s27, 0
        %s343 = smul.addr %s342, 4
        %s344 = scalar_lea.vmem %s0, %s343
        %p345 = pneg %p60
        %p346 = pneg %p57
        %p347 = pneg %p81
        %p348 = pneg %p78
        %s349 = smul.u32 5, %s27
        %s350 = smul.u32 2, %s26
        %p351 = scmp.lt.s32.totalorder %s25, 1
        %s352 = scalar_select %p351, %s25, 1
        %p353 = scmp.lt.s32.totalorder %s349, 4
        %s354 = scalar_select %p353, %s349, 4
        %p355 = scmp.lt.s32.totalorder %s350, 1
        %s356 = scalar_select %p355, %s350, 1
        %s357 = smul.addr %s354, 2
        %s358 = sadd.s32 %s356, %s357
        %s359 = smul.addr %s352, 10
        %s360 = sadd.s32 %s358, %s359
        %s361 = smul.addr %s360, 8
        %s362 = scalar_lea.vmem %s2, %s361
        %p363 = pneg %p111
        %p364 = pneg %p108
        %s365 = smul.u32 5, %s27
        %s366 = smul.u32 2, %s26
        %p367 = scmp.lt.s32.totalorder %s25, 1
        %s368 = scalar_select %p367, %s25, 1
        %p369 = scmp.lt.s32.totalorder %s365, 4
        %s370 = scalar_select %p369, %s365, 4
        %p371 = scmp.lt.s32.totalorder %s366, 1
        %s372 = scalar_select %p371, %s366, 1
        %s373 = smul.addr %s370, 2
        %s374 = sadd.s32 %s372, %s373
        %s375 = smul.addr %s368, 10
        %s376 = sadd.s32 %s374, %s375
        %s377 = smul.addr %s376, 8
        %s378 = scalar_lea.vmem %s3, %s377
        %p379 = pneg %p141
        %p380 = pneg %p138
        %s381 = smul.u32 5, %s27
        %s382 = smul.u32 2, %s26
        %p383 = scmp.lt.s32.totalorder %s25, 1
        %s384 = scalar_select %p383, %s25, 1
        %p385 = scmp.lt.s32.totalorder %s381, 4
        %s386 = scalar_select %p385, %s381, 4
        %p387 = scmp.lt.s32.totalorder %s382, 1
        %s388 = scalar_select %p387, %s382, 1
        %s389 = smul.addr %s386, 2
        %s390 = sadd.s32 %s388, %s389
        %s391 = smul.addr %s384, 10
        %s392 = sadd.s32 %s390, %s391
        %s393 = smul.addr %s392, 8
        %s394 = scalar_lea.vmem %s4, %s393
        %p395 = pneg %p171
        %p396 = pneg %p168
        %s397 = smul.u32 5, %s27
        %s398 = smul.u32 2, %s26
        %p399 = scmp.lt.s32.totalorder %s25, 1
        %s400 = scalar_select %p399, %s25, 1
        %p401 = scmp.lt.s32.totalorder %s397, 4
        %s402 = scalar_select %p401, %s397, 4
        %p403 = scmp.lt.s32.totalorder %s398, 1
        %s404 = scalar_select %p403, %s398, 1
        %s405 = smul.addr %s402, 2
        %s406 = sadd.s32 %s404, %s405
        %s407 = smul.addr %s400, 10
        %s408 = sadd.s32 %s406, %s407
        %s409 = smul.addr %s408, 8
        %s410 = scalar_lea.vmem %s5, %s409
        %p411 = pneg %p201
        %p412 = pneg %p198
        %p413 = pneg %p229
        %p414 = pneg %p226
        %s415 = sand.u32 %s216, 1
        %s416 = scalar_lea.sflag [#allocation4], %s415
        %s417 = sand.u32 %s216, 1
        %s418 = smul.addr %s417, 16
        %s419 = scalar_lea.vmem [#allocation3], %s418
        %p420 = scmp.lt.s32.totalorder %s27, 0
        %s421 = scalar_select %p420, %s27, 0
        %s422 = smul.addr %s421, 4
        %s423 = scalar_lea.vmem %s0, %s422
        %s424 = smul.u32 5, %s27
        %s425 = smul.u32 2, %s26
        %p426 = scmp.lt.s32.totalorder %s25, 1
        %s427 = scalar_select %p426, %s25, 1
        %p428 = scmp.lt.s32.totalorder %s424, 4
        %s429 = scalar_select %p428, %s424, 4
        %p430 = scmp.lt.s32.totalorder %s425, 1
        %s431 = scalar_select %p430, %s425, 1
        %s432 = smul.addr %s429, 2
        %s433 = sadd.s32 %s431, %s432
        %s434 = smul.addr %s427, 10
        %s435 = sadd.s32 %s433, %s434
        %s436 = smul.addr %s435, 8
        %s437 = scalar_lea.vmem %s2, %s436
        %s438 = smul.u32 5, %s27
        %s439 = smul.u32 2, %s26
        %s440 = smul.u32 5, %s27
        %s441 = smul.u32 2, %s26
        %p442 = scmp.lt.s32.totalorder %s25, 1
        %s443 = scalar_select %p442, %s25, 1
        %p444 = scmp.lt.s32.totalorder %s440, 4
        %s445 = scalar_select %p444, %s440, 4
        %p446 = scmp.lt.s32.totalorder %s441, 1
        %s447 = scalar_select %p446, %s441, 1
        %s448 = smul.addr %s445, 2
        %s449 = sadd.s32 %s447, %s448
        %s450 = smul.addr %s443, 10
        %s451 = sadd.s32 %s449, %s450
        %s452 = smul.addr %s451, 8
        %s453 = scalar_lea.vmem %s3, %s452
        %s454 = smul.u32 5, %s27
        %s455 = smul.u32 2, %s26
        %s456 = smul.u32 5, %s27
        %s457 = smul.u32 2, %s26
        %p458 = scmp.lt.s32.totalorder %s25, 1
        %s459 = scalar_select %p458, %s25, 1
        %p460 = scmp.lt.s32.totalorder %s456, 4
        %s461 = scalar_select %p460, %s456, 4
        %p462 = scmp.lt.s32.totalorder %s457, 1
        %s463 = scalar_select %p462, %s457, 1
        %s464 = smul.addr %s461, 2
        %s465 = sadd.s32 %s463, %s464
        %s466 = smul.addr %s459, 10
        %s467 = sadd.s32 %s465, %s466
        %s468 = smul.addr %s467, 8
        %s469 = scalar_lea.vmem %s4, %s468
        %s470 = smul.u32 5, %s27
        %s471 = smul.u32 2, %s26
        %s472 = smul.u32 5, %s27
        %s473 = smul.u32 2, %s26
        %p474 = scmp.lt.s32.totalorder %s25, 1
        %s475 = scalar_select %p474, %s25, 1
        %p476 = scmp.lt.s32.totalorder %s472, 4
        %s477 = scalar_select %p476, %s472, 4
        %p478 = scmp.lt.s32.totalorder %s473, 1
        %s479 = scalar_select %p478, %s473, 1
        %s480 = smul.addr %s477, 2
        %s481 = sadd.s32 %s479, %s480
        %s482 = smul.addr %s475, 10
        %s483 = sadd.s32 %s481, %s482
        %s484 = smul.addr %s483, 8
        %s485 = scalar_lea.vmem %s5, %s484
        %s486 = smul.u32 5, %s27
        %s487 = smul.u32 2, %s26
        %s488 = smul.u32 2, %s26
        %p490 = scmp.eq.s32.totalorder %s27, 0
        // Predicated region
        $region45: #{tpu_custom_call.1} parent=43 // pred_check
          %p491 = pneg %p490
        $region46: #{tpu_custom_call.1} parent=43 // pred_check_branch
          %493 = sbr.rel (%p491) target = $region48
        $region47: #{tpu_custom_call.1} parent=43 // pred_region
          %494 = vst [vmem:[#allocation2] sm:$0xff] 0.0
          %495 = vst [vmem:[#allocation2 + $0x8] sm:$0xff] 0.0
        $region48: #{tpu_custom_call.1} parent=43 // pred_fallthru
          _
        %v496 = vld [vmem:[%s437] sm:$0xff]
        %v497 = vld [vmem:[%s437 + $0x8] sm:$0xff]
        %v498 = vld [vmem:[%s437 + $0x10] sm:$0xff]
        %v499 = vld [vmem:[%s437 + $0x18] sm:$0xff]
        %v500 = vld [vmem:[%s437 + $0x20] sm:$0xff]
        %v501 = vld [vmem:[%s437 + $0x28] sm:$0xff]
        %v502 = vld [vmem:[%s437 + $0x30] sm:$0xff]
        %v503 = vld [vmem:[%s437 + $0x38] sm:$0xff]
        %v504 = vld [vmem:[%s437 + $0x40] sm:$0xf]
        %v505 = vld [vmem:[%s437 + $0x48] sm:$0xf]
        %v506 = vld [vmem:[%s453] sm:$0xff]
        %v507 = vld [vmem:[%s453 + $0x8] sm:$0xff]
        %v508 = vld [vmem:[%s453 + $0x10] sm:$0xff]
        %v509 = vld [vmem:[%s453 + $0x18] sm:$0xff]
        %v510 = vld [vmem:[%s453 + $0x20] sm:$0xff]
        %v511 = vld [vmem:[%s453 + $0x28] sm:$0xff]
        %v512 = vld [vmem:[%s453 + $0x30] sm:$0xff]
        %v513 = vld [vmem:[%s453 + $0x38] sm:$0xff]
        %v514 = vld [vmem:[%s453 + $0x40] sm:$0xf]
        %v515 = vld [vmem:[%s453 + $0x48] sm:$0xf]
        %v516 = vadd.f32 %v496, %v506
        %v517 = vadd.f32 %v497, %v507
        %v518 = vadd.f32 %v498, %v508
        %v519 = vadd.f32 %v499, %v509
        %v520 = vadd.f32 %v500, %v510
        %v521 = vadd.f32 %v501, %v511
        %v522 = vadd.f32 %v502, %v512
        %v523 = vadd.f32 %v503, %v513
        %v524 = vadd.f32 %v504, %v514
        %v525 = vadd.f32 %v505, %v515
        %v526 = vld [vmem:[%s469] sm:$0xff]
        %v527 = vld [vmem:[%s469 + $0x8] sm:$0xff]
        %v528 = vld [vmem:[%s469 + $0x10] sm:$0xff]
        %v529 = vld [vmem:[%s469 + $0x18] sm:$0xff]
        %v530 = vld [vmem:[%s469 + $0x20] sm:$0xff]
        %v531 = vld [vmem:[%s469 + $0x28] sm:$0xff]
        %v532 = vld [vmem:[%s469 + $0x30] sm:$0xff]
        %v533 = vld [vmem:[%s469 + $0x38] sm:$0xff]
        %v534 = vld [vmem:[%s469 + $0x40] sm:$0xf]
        %v535 = vld [vmem:[%s469 + $0x48] sm:$0xf]
        %v536 = vadd.f32 %v516, %v526
        %v537 = vadd.f32 %v517, %v527
        %v538 = vadd.f32 %v518, %v528
        %v539 = vadd.f32 %v519, %v529
        %v540 = vadd.f32 %v520, %v530
        %v541 = vadd.f32 %v521, %v531
        %v542 = vadd.f32 %v522, %v532
        %v543 = vadd.f32 %v523, %v533
        %v544 = vadd.f32 %v524, %v534
        %v545 = vadd.f32 %v525, %v535
        %v546 = vld [vmem:[%s485] sm:$0xff]
        %v547 = vld [vmem:[%s485 + $0x8] sm:$0xff]
        %v548 = vld [vmem:[%s485 + $0x10] sm:$0xff]
        %v549 = vld [vmem:[%s485 + $0x18] sm:$0xff]
        %v550 = vld [vmem:[%s485 + $0x20] sm:$0xff]
        %v551 = vld [vmem:[%s485 + $0x28] sm:$0xff]
        %v552 = vld [vmem:[%s485 + $0x30] sm:$0xff]
        %v553 = vld [vmem:[%s485 + $0x38] sm:$0xff]
        %v554 = vld [vmem:[%s485 + $0x40] sm:$0xf]
        %v555 = vld [vmem:[%s485 + $0x48] sm:$0xf]
        %v556 = vadd.f32 %v536, %v546
        %v557 = vadd.f32 %v537, %v547
        %v558 = vadd.f32 %v538, %v548
        %v559 = vadd.f32 %v539, %v549
        %v560 = vadd.f32 %v540, %v550
        %v561 = vadd.f32 %v541, %v551
        %v562 = vadd.f32 %v542, %v552
        %v563 = vadd.f32 %v543, %v553
        %v564 = vadd.f32 %v544, %v554
        %v565 = vadd.f32 %v545, %v555
        %v566 = vpack.c.bf16 %v558, %v556
        %v567 = vpack.c.bf16 %v559, %v557
        %v568 = vpack.c.bf16 %v562, %v560
        %v569 = vpack.c.bf16 %v563, %v561
        %v570 = vpack.c.bf16 %v564, %v564
        %v571 = vpack.c.bf16 %v565, %v565
        %v572 = vld [vmem:[#allocation2] sm:$0xff]
        %v573 = vld [vmem:[#allocation2 + $0x8] sm:$0xff]
        %v574 = vld [vmem:[%s423] sm:$0xf]
        %vm575 = vcmask 293888
        %v577 = vsel %vm575, %v574, 0
        %vm579 = vcmask 1041408
        %v581 = vsel %vm579, %v570, 0
        %v584 = vsel %vm579, %v571, 0
        %586 = vmatprep.subr.bf16.mxu0 %v567
        %587 = vmatpush1.bf16.msra.mxu0 %v566
        %588 = vmatprep.subr.bf16.mxu0 %v569
        %589 = vmatpush1.bf16.msra.mxu0 %v568
        %590 = vmatprep.subr.bf16.mxu0 %v584
        %591 = vmatpush1.bf16.msra.mxu0 %v581
        %592 = vmatprep.subr.bf16.mxu0 0
        %593 = vmatpush1.bf16.msra.mxu0 0
        %594 = vmatprep.subr.bf16.mxu0 0
        %595 = vmatpush1.bf16.msra.mxu0 0
        %596 = vmatprep.subr.bf16.mxu0 0
        %597 = vmatpush1.bf16.msra.mxu0 0
        %598 = vmatprep.subr.bf16.mxu0 0
        %599 = vmatpush1.bf16.msra.mxu0 0
        %600 = vmatprep.subr.bf16.mxu0 0
        %601 = vmatpush1.bf16.msra.mxu0 0
        %602 = vmatprep.subr.bf16.mxu0 0
        %603 = vmatpush1.bf16.msra.mxu0 0
        %604 = vmatprep.subr.bf16.mxu0 0
        %605 = vmatpush1.bf16.msra.mxu0 0
        %606 = vmatprep.subr.bf16.mxu0 0
        %607 = vmatpush1.bf16.msra.mxu0 0
        %608 = vmatprep.subr.bf16.mxu0 0
        %609 = vmatpush1.bf16.msra.mxu0 0
        %610 = vmatprep.subr.bf16.mxu0 0
        %611 = vmatpush1.bf16.msra.mxu0 0
        %612 = vmatprep.subr.bf16.mxu0 0
        %613 = vmatpush1.bf16.msra.mxu0 0
        %614 = vmatprep.subr.bf16.mxu0 0
        %615 = vmatpush1.bf16.msra.mxu0 0
        %616 = vmatprep.subr.bf16.mxu0 0
        %617 = vmatpush1.bf16.msra.mxu0 0
        %618 = vmatprep.mubr.bf16.mxu0 0
        %619 = vmatmul.mubr.bf16.gmra.mrb[0].mxu0 %v577
        %v620 = vpop.f32.mrb[0].mxu0
        %v621 = vadd.f32 0.0, %v620
        %v622 = vpop.f32.mrb[0].mxu0
        %v623 = vadd.f32 0.0, %v622
        %v624 = vpop.f32.mrb[0].mxu0
        %v625 = vpop.f32.mrb[0].mxu0
        %626 = vdwg.mxu0
        %v627 = vadd.f32 %v572, %v621
        %v628 = vadd.f32 %v573, %v623
        %629 = vst [vmem:[#allocation2] sm:$0xff] %v627
        %630 = vst [vmem:[#allocation2 + $0x8] sm:$0xff] %v628
        // Predicated region
        $region49: #{tpu_custom_call.1} parent=43 // pred_check
          %p631 = pneg %p490
        $region50: #{tpu_custom_call.1} parent=43 // pred_check_branch
          %633 = sbr.rel (%p631) target = $region52
        $region51: #{tpu_custom_call.1} parent=43 // pred_region
          %v634 = vld [vmem:[#allocation2] sm:$0xff]
          %v635 = vld [vmem:[#allocation2 + $0x8] sm:$0xff]
          %v636 = vld [vmem:[%s1] sm:$0xff]
          %638 = vset.pattern.permute.xlu0 0
          %639 = vperm.xlu0 %638, %v636
          %v640 = vpop.permute.xlu0 %639
          %v642 = vadd.f32 %v634, %v640
          %v643 = vadd.f32 %v635, %v640
          %644 = vst [vmem:[%s419] sm:$0xff] %v642
          %645 = vst [vmem:[%s419 + $0x8] sm:$0xff] %v643
        $region52: #{tpu_custom_call.1} parent=43 // pred_fallthru
          _
        %s646 = sand.u32 %s216, 1
        %s647 = scalar_lea.sflag [#allocation4], %s646
        %s648 = sand.u32 %s216, 1
        %s649 = smul.addr %s648, 16
        %s650 = scalar_lea.vmem [#allocation3], %s649
        // Predicated region
        $region53: #{tpu_custom_call.1} parent=43 // pred_check
          %p651 = pneg %p226
        $region54: #{tpu_custom_call.1} parent=43 // pred_check_branch
          %653 = sbr.rel (%p651) target = $region56
        $region55: #{tpu_custom_call.1} parent=43 // pred_region
          %s654 = smul.u32 2, %s26
          %s656 = ssub.s32 256, 256
          %657 = vsyncadd %s647, %s656
          %s658 = smul.addr %s25, 2
          %s659 = sadd.s32 %s654, %s658
          %s660 = smul.addr %s659, 128
          %s661 = scalar_lea.hbm %s6, %s660
          %s663 = sshll.u32 %s650, 4
          %s664 = int_to_ptr.vmem [resolvable:$true] %s663
          %666 = dma.vmem_to_hbm [thread:$0]  %s664, 256, %s661, %s647
        $region56: #{tpu_custom_call.1} parent=43 // pred_fallthru
          _
      $region44: #{tpu_custom_call.1} parent=5 // pred_fallthru
        _
      %p667 = scmp.le.s32.totalorder 2, %s15
      // Predicated region
      $region57: #{tpu_custom_call.1} parent=5 // pred_check
        %p668 = pneg %p667
      $region58: #{tpu_custom_call.1} parent=5 // pred_check_branch
        %670 = sbr.rel (%p668) target = $region60
      $region59: #{tpu_custom_call.1} parent=5 // pred_region
        %s671 = ssub.s32 %s15, 2
        // Predicated region
        $region61: #{tpu_custom_call.1} parent=59 // pred_check
          %p672 = pneg %p232
        $region62: #{tpu_custom_call.1} parent=59 // pred_check_branch
          %674 = sbr.rel (%p672) target = $region64
        $region63: #{tpu_custom_call.1} parent=59 // pred_region
          %s675 = sand.u32 %s217, 1
          %s676 = scalar_lea.sflag [#allocation4], %s675
          %s677 = sand.u32 %s217, 1
          %s678 = smul.addr %s677, 16
          %s679 = scalar_lea.vmem [#allocation3], %s678
          %680 = dma.done %s676, 256
        $region64: #{tpu_custom_call.1} parent=59 // pred_fallthru
          _
      $region60: #{tpu_custom_call.1} parent=5 // pred_fallthru
        _
    $region6: #{tpu_custom_call.1} parent=1 // loop_footer
      %s19 = sadd.s32 1, %s15
    $region7: #{tpu_custom_call.1} parent=1 // loop_footer_branch
      %14 = sbr.rel target = $region3
    $region8: #{tpu_custom_call.1} parent=1 // loop_exit
      _
    %681 = vsyncpa [#allocation4], 1
    %s682 = scalar_lea.sflag [#allocation4], 1
    %683 = vsyncpa %s682, 1

</llo_original>
